<compile_context>
chip_gen: v7x
topology: tpu7x:2x2x1
jax: 0.10.0
libtpu: 0.0.40
codegen_flags: <defaults>
</compile_context>

<pallas_src>
import functools

import jax
import jax.numpy as jnp
from jax.experimental import pallas as pl
from jax.experimental.pallas import tpu as pltpu


# --------------------------------------------------------------------------- #
# Kernel
# --------------------------------------------------------------------------- #
def _emb_score_kernel(tgt_ref, msa_ref, word_ref, pos_ref, gamma_ref, beta_ref,
                      emb_out_ref, msa_out_ref, counts_ref, *, inv_m):
    # tgt_ref:     (1, Bt, S)      int32  (one batch block; same block for all m)
    # msa_ref:     (1, Mt, Bt, S)  int32  (this step's MSA-row chunk)
    # word_ref:    (Vp, H)         bf16   (full table, vocab padded to 128 lanes)
    # pos_ref:     (S, H)          f32    (position rows 0..S-1)
    # gamma/beta:  (1, H)          f32
    # emb_out_ref / msa_out_ref: (Bt, S, H) f32  (written on the last m step)
    # counts_ref:  (Bt, S, Vp)     f32 VMEM scratch; persists across the m axis
    mi = pl.program_id(1)
    _, Bt, S = tgt_ref.shape
    Mt = msa_ref.shape[1]
    Vp, H = word_ref.shape

    iota_v = jax.lax.broadcasted_iota(jnp.int32, (Bt, S, Vp), 2)

    # ---- MSA token counts: accumulate this chunk's Mt rows locally, then do a
    #      single read-modify-write of the persistent counts scratch -----------
    local = (msa_ref[0, 0][:, :, None] == iota_v).astype(jnp.float32)
    for m in range(1, Mt):                        # static unroll (Mt is small)
        local = local + (msa_ref[0, m][:, :, None] == iota_v).astype(jnp.float32)

    @pl.when(mi == 0)
    def _():
        counts_ref[...] = local

    @pl.when(mi > 0)
    def _():
        counts_ref[...] = counts_ref[...] + local

    # ---- finalize on the last MSA chunk: fused MXU gathers + LayerNorm -------
    @pl.when(mi == pl.num_programs(1) - 1)
    def _():
        lhs_dtype = word_ref.dtype
        table = word_ref[...]                                        # (Vp, H)
        # Target one-hot built directly in (sublane=S, lane=V) layout.  0/1 and
        # integer counts <= 256 are exact in bf16; only the table rounds.
        tgt_oh = (tgt_ref[0][:, :, None] == iota_v).astype(lhs_dtype)
        counts = counts_ref[...].astype(lhs_dtype)
        # Two MXU passes (no concat copy); bf16 operands, f32 accumulation.
        words = jnp.dot(tgt_oh.reshape(Bt * S, Vp), table,
                        preferred_element_type=jnp.float32).reshape(Bt, S, H)
        msa_sum = jnp.dot(counts.reshape(Bt * S, Vp), table,
                          preferred_element_type=jnp.float32).reshape(Bt, S, H)
        msa_emb = msa_sum * inv_m        # fold the 1/M mean AFTER the matmul

        # sum + LayerNorm (eps = 1e-12, BERT style); dropout = identity.
        emb = words + pos_ref[...] + msa_emb
        mu = jnp.mean(emb, axis=-1, keepdims=True)
        xc = emb - mu
        var = jnp.mean(xc * xc, axis=-1, keepdims=True)
        out = xc * jax.lax.rsqrt(var + 1e-12) * gamma_ref[...] + beta_ref[...]

        emb_out_ref[...] = out
        msa_out_ref[...] = msa_emb


# --------------------------------------------------------------------------- #
# Block-size / VMEM heuristics (generation-aware)
# --------------------------------------------------------------------------- #
def _vmem_need_bytes(Bt, Mt, S, H, Vp):
    """Rough per-step VMEM footprint (bytes) used to size Bt.  Pipelined blocks
    are double-buffered (x2); the counts scratch and live in-kernel
    intermediates count once.  Deliberately generous."""
    table = 2 * Vp * H * 2                         # bf16 word table
    invar = 2 * (S * H + 2 * H) * 4                # pos + gamma + beta
    ids = 2 * (Bt * S + Bt * Mt * S) * 4           # target + MSA id blocks
    outs = 2 * 2 * Bt * S * H * 4                  # two f32 output blocks
    counts = Bt * S * Vp * 4                       # persistent counts scratch
    live = Bt * S * Vp * 12 + Bt * S * H * 32      # iota/local/bf16 LHS + LN temps
    return table + invar + ids + outs + counts + live


def _pick_block_m(M, target=32):
    """MSA rows per grid step: the largest divisor of M that is <= target
    (bounds the per-step ids block and the local compare-accumulate chain)."""
    best = 1
    for d in range(1, min(M, target) + 1):
        if M % d == 0:
            best = d
    return best


def _pick_block_b(B, Mt, S, H, Vp, vmem_budget, multi_core):
    """Batch rows per grid step: largest divisor of B fitting the VMEM budget,
    capped at ~2048 matmul rows/step, and (v7x only) capped so the 'parallel'
    batch axis has >= 2 steps to feed both TensorCores."""
    row_cap = max(1, -(-2048 // S))
    core_cap = max(1, B // 2) if (multi_core and B >= 2) else B
    best = 1
    for d in range(1, B + 1):
        if B % d or d > row_cap or d > core_cap:
            continue
        if _vmem_need_bytes(d, Mt, S, H, Vp) <= vmem_budget:
            best = d
    return best


# --------------------------------------------------------------------------- #
# pallas_call wrapper
# --------------------------------------------------------------------------- #
@functools.partial(jax.jit,
                   static_argnames=("Bt", "Mt", "Vp", "vmem_limit", "table_dtype"))
def _embeddings_score_impl(target_ids, input_ids, word_table, pos_table, gamma,
                           beta, *, Bt, Mt, Vp, vmem_limit, table_dtype):
    B, S = target_ids.shape
    M = input_ids.shape[1]
    V, H = word_table.shape
    G, Mc = B // Bt, M // Mt

    # Pad vocab (compare lane dim / matmul K dim) to a multiple of 128 with zero
    # rows: ids < V never hit them, so they contribute nothing.
    word_p = word_table.astype(table_dtype)
    if Vp != V:
        word_p = jnp.pad(word_p, ((0, Vp - V), (0, 0)))

    tgt_g = target_ids.astype(jnp.int32).reshape(G, Bt, S)          # pure reshape
    # (G, M, Bt, S): per-row slices inside the kernel then index only outer
    # (non-tiled) ref dims -> guaranteed lowering.  The transpose touches only
    # B*M*S*4 bytes of ids (small vs. the (B,S,H) outputs).
    msa_g = (input_ids.astype(jnp.int32)
             .reshape(G, Bt, M, S).transpose(0, 2, 1, 3))
    pos_s = pos_table[:S].astype(jnp.float32)                       # (S, H)
    gamma2 = gamma.astype(jnp.float32).reshape(1, H)
    beta2 = beta.astype(jnp.float32).reshape(1, H)

    kernel = functools.partial(_emb_score_kernel, inv_m=1.0 / M)

    emb, msa = pl.pallas_call(
        kernel,
        out_shape=(jax.ShapeDtypeStruct((B, S, H), jnp.float32),
                   jax.ShapeDtypeStruct((B, S, H), jnp.float32)),
        grid=(G, Mc),
        in_specs=[
            pl.BlockSpec((1, Bt, S), lambda g, m: (g, 0, 0)),        # target ids
            pl.BlockSpec((1, Mt, Bt, S), lambda g, m: (g, m, 0, 0)),  # MSA id chunk
            pl.BlockSpec((Vp, H), lambda g, m: (0, 0)),              # word table (invariant)
            pl.BlockSpec((S, H), lambda g, m: (0, 0)),               # pos rows 0..S-1
            pl.BlockSpec((1, H), lambda g, m: (0, 0)),               # gamma
            pl.BlockSpec((1, H), lambda g, m: (0, 0)),               # beta
        ],
        out_specs=(pl.BlockSpec((Bt, S, H), lambda g, m: (g, 0, 0)),
                   pl.BlockSpec((Bt, S, H), lambda g, m: (g, 0, 0))),
        scratch_shapes=[pltpu.VMEM((Bt, S, Vp), jnp.float32)],       # MSA counts
        compiler_params=pltpu.CompilerParams(
            dimension_semantics=("parallel", "arbitrary"),
            vmem_limit_bytes=vmem_limit),
    )(tgt_g, msa_g, word_p, pos_s, gamma2, beta2)
    return emb, msa


def embeddings_score(target_ids, input_ids, word_table, pos_table, gamma, beta,
                     *, block_b=None, block_m=None, table_dtype=jnp.bfloat16):
    """target_ids: (B, S) int, input_ids: (B, M, S) int.  Returns (emb, msa)."""
    B, S = target_ids.shape
    assert input_ids.shape[0] == B and input_ids.shape[2] == S
    M = input_ids.shape[1]
    V, H = word_table.shape
    Vp = max(128, ((V + 127) // 128) * 128)

    # Generation-aware sizing: VMEM capacity + (v7x) 2-TensorCore megacore cap.
    try:
        kind = jax.devices()[0].device_kind.lower()
    except Exception:
        kind = ""
    multi_core = "v7" in kind
    try:
        vmem_cap = int(pltpu.get_tpu_info().vmem_capacity_bytes)
    except Exception:
        vmem_cap = (64 if multi_core else 128) * 1024 * 1024

    Mt = block_m if block_m is not None else _pick_block_m(M)
    assert M % Mt == 0, f"block_m={Mt} must divide M={M}"
    Bt = (block_b if block_b is not None
          else _pick_block_b(B, Mt, S, H, Vp, int(0.70 * vmem_cap), multi_core))
    assert B % Bt == 0, f"block_b={Bt} must divide B={B}"

    vmem_limit = int(0.85 * vmem_cap)
    return _embeddings_score_impl(target_ids, input_ids, word_table, pos_table,
                                  gamma, beta, Bt=Bt, Mt=Mt, Vp=Vp,
                                  vmem_limit=vmem_limit, table_dtype=table_dtype)


# --------------------------------------------------------------------------- #
# Reference + test
# --------------------------------------------------------------------------- #
def _reference(target_ids, input_ids, word_table, pos_table, gamma, beta):
    """Pure-JAX reference mirroring the PyTorch forward (f32 throughout)."""
    B, S = target_ids.shape
    H = word_table.shape[1]
    words = word_table[target_ids]                                   # (B, S, H)
    msa = word_table[input_ids.reshape(-1)].reshape(B, -1, S, H).mean(1)
    pos = pos_table[jnp.arange(S)][None, :, :]
    x = words + pos + msa
    mu = x.mean(-1, keepdims=True)
    var = ((x - mu) ** 2).mean(-1, keepdims=True)
    out = (x - mu) / jnp.sqrt(var + 1e-12) * gamma + beta
    return out, msa


if __name__ == "__main__":
    # Small shapes consistent with the module (B*M*S % H == 0 so the torch
    # `.reshape([-1, hidden])` path is well defined).
    B, M, S, H = 4, 4, 8, 32
    VOCAB, MAX_POS = 26, 40            # protein-like vocab (padded to 128 lanes)
    DROPOUT_RATE = 0.1                 # identity at inference

    key = jax.random.PRNGKey(0)
    k_w, k_p, k_t, k_i = jax.random.split(key, 4)

    # Deterministic params (nn.Embedding-like; LayerNorm gamma=1, beta=0).
    word_table = jax.random.normal(k_w, (VOCAB, H), dtype=jnp.float32) * 0.02
    pos_table = jax.random.normal(k_p, (MAX_POS, H), dtype=jnp.float32) * 0.02
    gamma = jnp.ones((H,), dtype=jnp.float32)
    beta = jnp.zeros((H,), dtype=jnp.float32)

    target_ids = jax.random.randint(k_t, (B, S), 0, VOCAB, dtype=jnp.int32)
    input_ids = jax.random.randint(k_i, (B, M, S), 0, VOCAB, dtype=jnp.int32)

    emb, msa = embeddings_score(target_ids, input_ids, word_table, pos_table,
                                gamma, beta)
    jax.block_until_ready((emb, msa))
    assert emb.shape == (B, S, H) and msa.shape == (B, S, H)

    # (1) Against the exact f32 module semantics: loose tolerance — the kernel
    #     deliberately rounds the word table to bf16 for the MXU gathers.
    ref_emb, ref_msa = _reference(target_ids, input_ids, word_table, pos_table,
                                  gamma, beta)
    assert jnp.allclose(emb, ref_emb, atol=2e-2, rtol=2e-2), "emb vs f32 ref"
    assert jnp.allclose(msa, ref_msa, atol=1e-3, rtol=1e-3), "msa vs f32 ref"

    # (2) Against the same math with a bf16-rounded table: tight tolerance —
    #     isolates the deliberate precision choice from any kernel-logic bug.
    wt_b = word_table.astype(jnp.bfloat16).astype(jnp.float32)
    ref_emb_b, ref_msa_b = _reference(target_ids, input_ids, wt_b, pos_table,
                                      gamma, beta)
    assert jnp.allclose(emb, ref_emb_b, atol=1e-4, rtol=1e-4), "emb vs bf16-table ref"
    assert jnp.allclose(msa, ref_msa_b, atol=1e-5, rtol=1e-5), "msa vs bf16-table ref"

    print("KERNEL_OK")
</pallas_src>

<mosaic_0001>
module attributes {stable_mosaic.version = 11 : i64} {
  func.func @_emb_score_kernel(%arg0: i32, %arg1: i32, %arg2: memref<1x4x8xi32, #tpu.memory_space<vmem>>, %arg3: memref<1x4x4x8xi32, #tpu.memory_space<vmem>>, %arg4: memref<128x32xbf16, #tpu.memory_space<vmem>>, %arg5: memref<8x32xf32, #tpu.memory_space<vmem>>, %arg6: memref<1x32xf32, #tpu.memory_space<vmem>>, %arg7: memref<1x32xf32, #tpu.memory_space<vmem>>, %arg8: memref<4x8x32xf32, #tpu.memory_space<vmem>>, %arg9: memref<4x8x32xf32, #tpu.memory_space<vmem>>, %arg10: memref<4x8x128xf32, #tpu.memory_space<vmem>>) attributes {dimension_semantics = [#tpu.dimension_semantics<parallel>, #tpu.dimension_semantics<arbitrary>], iteration_bounds = array<i64: 1, 1>, scalar_prefetch = 0 : i64, scratch_operands = 1 : i64, tpu.core_type = #tpu.core_type<tc>, window_params = [{transform_indices = @transform_0, window_bounds = array<i64: 1, 4, 8>}, {transform_indices = @transform_1, window_bounds = array<i64: 1, 4, 4, 8>}, {pipeline_mode = #tpu.pipeline_mode<synchronous>, transform_indices = @transform_2, window_bounds = array<i64: 128, 32>}, {pipeline_mode = #tpu.pipeline_mode<synchronous>, transform_indices = @transform_3, window_bounds = array<i64: 8, 32>}, {pipeline_mode = #tpu.pipeline_mode<synchronous>, transform_indices = @transform_4, window_bounds = array<i64: 1, 32>}, {pipeline_mode = #tpu.pipeline_mode<synchronous>, transform_indices = @transform_5, window_bounds = array<i64: 1, 32>}, {transform_indices = @transform_6, window_bounds = array<i64: 4, 8, 32>}, {transform_indices = @transform_7, window_bounds = array<i64: 4, 8, 32>}]} {
    %0 = tpu.iota {dimensions = array<i32: 2>} : vector<4x8x128xi32>
    %c0 = arith.constant 0 : index
    %c0_0 = arith.constant 0 : index
    %c0_1 = arith.constant 0 : index
    %c0_2 = arith.constant 0 : index
    %1 = vector.load %arg3[%c0, %c0_0, %c0_1, %c0_2] : memref<1x4x4x8xi32, #tpu.memory_space<vmem>>, vector<1x1x4x8xi32>
    %2 = vector.shape_cast %1 : vector<1x1x4x8xi32> to vector<4x8xi32>
    %3 = vector.shape_cast %2 : vector<4x8xi32> to vector<4x8x1xi32>
    %4 = vector.broadcast %3 : vector<4x8x1xi32> to vector<4x8x128xi32>
    %5 = arith.cmpi eq, %4, %0 : vector<4x8x128xi32>
    %6 = arith.extui %5 : vector<4x8x128xi1> to vector<4x8x128xi32>
    %7 = arith.sitofp %6 : vector<4x8x128xi32> to vector<4x8x128xf32>
    %c0_3 = arith.constant 0 : index
    %c1 = arith.constant 1 : index
    %c0_4 = arith.constant 0 : index
    %c0_5 = arith.constant 0 : index
    %8 = vector.load %arg3[%c0_3, %c1, %c0_4, %c0_5] : memref<1x4x4x8xi32, #tpu.memory_space<vmem>>, vector<1x1x4x8xi32>
    %9 = vector.shape_cast %8 : vector<1x1x4x8xi32> to vector<4x8xi32>
    %10 = vector.shape_cast %9 : vector<4x8xi32> to vector<4x8x1xi32>
    %11 = vector.broadcast %10 : vector<4x8x1xi32> to vector<4x8x128xi32>
    %12 = arith.cmpi eq, %11, %0 : vector<4x8x128xi32>
    %13 = arith.extui %12 : vector<4x8x128xi1> to vector<4x8x128xi32>
    %14 = arith.sitofp %13 : vector<4x8x128xi32> to vector<4x8x128xf32>
    %15 = arith.addf %7, %14 : vector<4x8x128xf32>
    %c0_6 = arith.constant 0 : index
    %c2 = arith.constant 2 : index
    %c0_7 = arith.constant 0 : index
    %c0_8 = arith.constant 0 : index
    %16 = vector.load %arg3[%c0_6, %c2, %c0_7, %c0_8] : memref<1x4x4x8xi32, #tpu.memory_space<vmem>>, vector<1x1x4x8xi32>
    %17 = vector.shape_cast %16 : vector<1x1x4x8xi32> to vector<4x8xi32>
    %18 = vector.shape_cast %17 : vector<4x8xi32> to vector<4x8x1xi32>
    %19 = vector.broadcast %18 : vector<4x8x1xi32> to vector<4x8x128xi32>
    %20 = arith.cmpi eq, %19, %0 : vector<4x8x128xi32>
    %21 = arith.extui %20 : vector<4x8x128xi1> to vector<4x8x128xi32>
    %22 = arith.sitofp %21 : vector<4x8x128xi32> to vector<4x8x128xf32>
    %23 = arith.addf %15, %22 : vector<4x8x128xf32>
    %c0_9 = arith.constant 0 : index
    %c3 = arith.constant 3 : index
    %c0_10 = arith.constant 0 : index
    %c0_11 = arith.constant 0 : index
    %24 = vector.load %arg3[%c0_9, %c3, %c0_10, %c0_11] : memref<1x4x4x8xi32, #tpu.memory_space<vmem>>, vector<1x1x4x8xi32>
    %25 = vector.shape_cast %24 : vector<1x1x4x8xi32> to vector<4x8xi32>
    %26 = vector.shape_cast %25 : vector<4x8xi32> to vector<4x8x1xi32>
    %27 = vector.broadcast %26 : vector<4x8x1xi32> to vector<4x8x128xi32>
    %28 = arith.cmpi eq, %27, %0 : vector<4x8x128xi32>
    %29 = arith.extui %28 : vector<4x8x128xi1> to vector<4x8x128xi32>
    %30 = arith.sitofp %29 : vector<4x8x128xi32> to vector<4x8x128xf32>
    %31 = arith.addf %23, %30 : vector<4x8x128xf32>
    %c0_i32 = arith.constant 0 : i32
    %32 = arith.cmpi eq, %arg1, %c0_i32 : i32
    %33 = arith.extui %32 : i1 to i32
    %c0_i32_12 = arith.constant 0 : i32
    %34 = arith.cmpi ne, %33, %c0_i32_12 : i32
    scf.if %34 {
      %c0_17 = arith.constant 0 : index
      %c0_18 = arith.constant 0 : index
      %c0_19 = arith.constant 0 : index
      %41 = vector.load %arg10[%c0_17, %c0_18, %c0_19] : memref<4x8x128xf32, #tpu.memory_space<vmem>>, vector<4x8x128xf32>
      tpu.vector_store %arg10[%c0_17, %c0_18, %c0_19], %31 {strides = array<i32>} : memref<4x8x128xf32, #tpu.memory_space<vmem>>, vector<4x8x128xf32>,
    } else {
    }
    %c0_i32_13 = arith.constant 0 : i32
    %35 = arith.cmpi sgt, %arg1, %c0_i32_13 : i32
    %36 = arith.extui %35 : i1 to i32
    %c0_i32_14 = arith.constant 0 : i32
    %37 = arith.cmpi ne, %36, %c0_i32_14 : i32
    scf.if %37 {
      %c0_17 = arith.constant 0 : index
      %c0_18 = arith.constant 0 : index
      %c0_19 = arith.constant 0 : index
      %41 = vector.load %arg10[%c0_17, %c0_18, %c0_19] : memref<4x8x128xf32, #tpu.memory_space<vmem>>, vector<4x8x128xf32>
      %42 = arith.addf %41, %31 : vector<4x8x128xf32>
      %c0_20 = arith.constant 0 : index
      %c0_21 = arith.constant 0 : index
      %c0_22 = arith.constant 0 : index
      %43 = vector.load %arg10[%c0_20, %c0_21, %c0_22] : memref<4x8x128xf32, #tpu.memory_space<vmem>>, vector<4x8x128xf32>
      tpu.vector_store %arg10[%c0_20, %c0_21, %c0_22], %42 {strides = array<i32>} : memref<4x8x128xf32, #tpu.memory_space<vmem>>, vector<4x8x128xf32>,
    } else {
    }
    %c0_i32_15 = arith.constant 0 : i32
    %38 = arith.cmpi eq, %arg1, %c0_i32_15 : i32
    %39 = arith.extui %38 : i1 to i32
    %c0_i32_16 = arith.constant 0 : i32
    %40 = arith.cmpi ne, %39, %c0_i32_16 : i32
    scf.if %40 {
      %c0_17 = arith.constant 0 : index
      %c0_18 = arith.constant 0 : index
      %41 = vector.load %arg4[%c0_17, %c0_18] : memref<128x32xbf16, #tpu.memory_space<vmem>>, vector<128x32xbf16>
      %c0_19 = arith.constant 0 : index
      %c0_20 = arith.constant 0 : index
      %c0_21 = arith.constant 0 : index
      %42 = vector.load %arg2[%c0_19, %c0_20, %c0_21] : memref<1x4x8xi32, #tpu.memory_space<vmem>>, vector<1x4x8xi32>
      %43 = vector.shape_cast %42 : vector<1x4x8xi32> to vector<4x8xi32>
      %44 = vector.shape_cast %43 : vector<4x8xi32> to vector<4x8x1xi32>
      %45 = vector.broadcast %44 : vector<4x8x1xi32> to vector<4x8x128xi32>
      %46 = arith.cmpi eq, %45, %0 : vector<4x8x128xi32>
      %47 = arith.extui %46 : vector<4x8x128xi1> to vector<4x8x128xi32>
      %48 = arith.sitofp %47 : vector<4x8x128xi32> to vector<4x8x128xf32>
      %49 = arith.truncf %48 : vector<4x8x128xf32> to vector<4x8x128xbf16>
      %c0_22 = arith.constant 0 : index
      %c0_23 = arith.constant 0 : index
      %c0_24 = arith.constant 0 : index
      %50 = vector.load %arg10[%c0_22, %c0_23, %c0_24] : memref<4x8x128xf32, #tpu.memory_space<vmem>>, vector<4x8x128xf32>
      %51 = arith.truncf %50 : vector<4x8x128xf32> to vector<4x8x128xbf16>
      %52 = vector.shape_cast %49 : vector<4x8x128xbf16> to vector<32x128xbf16>
      %cst = arith.constant dense<0.000000e+00> : vector<32x32xf32>
      %53 = tpu.matmul %52, %41, %cst {dimension_numbers = #tpu.dot_dimension_numbers<[1], [0], [0], [1], [0, 0, 1, 1], [], []>} : vector<32x128xbf16>, vector<128x32xbf16>, vector<32x32xf32> -> vector<32x32xf32>
      %54 = vector.shape_cast %53 : vector<32x32xf32> to vector<4x8x32xf32>
      %55 = vector.shape_cast %51 : vector<4x8x128xbf16> to vector<32x128xbf16>
      %cst_25 = arith.constant dense<0.000000e+00> : vector<32x32xf32>
      %56 = tpu.matmul %55, %41, %cst_25 {dimension_numbers = #tpu.dot_dimension_numbers<[1], [0], [0], [1], [0, 0, 1, 1], [], []>} : vector<32x128xbf16>, vector<128x32xbf16>, vector<32x32xf32> -> vector<32x32xf32>
      %57 = vector.shape_cast %56 : vector<32x32xf32> to vector<4x8x32xf32>
      %cst_26 = arith.constant 2.500000e-01 : f32
      %58 = vector.broadcast %cst_26 : f32 to vector<4x8x32xf32>
      %59 = arith.mulf %57, %58 : vector<4x8x32xf32>
      %c0_27 = arith.constant 0 : index
      %c0_28 = arith.constant 0 : index
      %60 = vector.load %arg5[%c0_27, %c0_28] : memref<8x32xf32, #tpu.memory_space<vmem>>, vector<8x32xf32>
      %61 = vector.shape_cast %60 : vector<8x32xf32> to vector<1x8x32xf32>
      %62 = vector.broadcast %61 : vector<1x8x32xf32> to vector<4x8x32xf32>
      %63 = arith.addf %54, %62 : vector<4x8x32xf32>
      %64 = arith.addf %63, %59 : vector<4x8x32xf32>
      %cst_29 = arith.constant dense<0.000000e+00> : vector<4x8xf32>
      %65 = vector.multi_reduction <add>, %64, %cst_29 [2] : vector<4x8x32xf32> to vector<4x8xf32>
      %66 = vector.shape_cast %65 : vector<4x8xf32> to vector<4x8x1xf32>
      %cst_30 = arith.constant 3.200000e+01 : f32
      %67 = vector.broadcast %cst_30 : f32 to vector<4x8x1xf32>
      %68 = arith.divf %66, %67 : vector<4x8x1xf32>
      %69 = vector.broadcast %68 : vector<4x8x1xf32> to vector<4x8x32xf32>
      %70 = arith.subf %64, %69 : vector<4x8x32xf32>
      %71 = arith.mulf %70, %70 : vector<4x8x32xf32>
      %cst_31 = arith.constant dense<0.000000e+00> : vector<4x8xf32>
      %72 = vector.multi_reduction <add>, %71, %cst_31 [2] : vector<4x8x32xf32> to vector<4x8xf32>
      %73 = vector.shape_cast %72 : vector<4x8xf32> to vector<4x8x1xf32>
      %cst_32 = arith.constant 3.200000e+01 : f32
      %74 = vector.broadcast %cst_32 : f32 to vector<4x8x1xf32>
      %75 = arith.divf %73, %74 : vector<4x8x1xf32>
      %cst_33 = arith.constant 9.99999996E-13 : f32
      %76 = vector.broadcast %cst_33 : f32 to vector<4x8x1xf32>
      %77 = arith.addf %75, %76 : vector<4x8x1xf32>
      %78 = math.rsqrt %77 : vector<4x8x1xf32>
      %79 = vector.broadcast %78 : vector<4x8x1xf32> to vector<4x8x32xf32>
      %80 = arith.mulf %70, %79 : vector<4x8x32xf32>
      %c0_34 = arith.constant 0 : index
      %c0_35 = arith.constant 0 : index
      %81 = vector.load %arg6[%c0_34, %c0_35] : memref<1x32xf32, #tpu.memory_space<vmem>>, vector<1x32xf32>
      %82 = vector.shape_cast %81 : vector<1x32xf32> to vector<1x1x32xf32>
      %83 = vector.broadcast %82 : vector<1x1x32xf32> to vector<4x8x32xf32>
      %84 = arith.mulf %80, %83 : vector<4x8x32xf32>
      %c0_36 = arith.constant 0 : index
      %c0_37 = arith.constant 0 : index
      %85 = vector.load %arg7[%c0_36, %c0_37] : memref<1x32xf32, #tpu.memory_space<vmem>>, vector<1x32xf32>
      %86 = vector.shape_cast %85 : vector<1x32xf32> to vector<1x1x32xf32>
      %87 = vector.broadcast %86 : vector<1x1x32xf32> to vector<4x8x32xf32>
      %88 = arith.addf %84, %87 : vector<4x8x32xf32>
      %c0_38 = arith.constant 0 : index
      %c0_39 = arith.constant 0 : index
      %c0_40 = arith.constant 0 : index
      %89 = vector.load %arg8[%c0_38, %c0_39, %c0_40] : memref<4x8x32xf32, #tpu.memory_space<vmem>>, vector<4x8x32xf32>
      tpu.vector_store %arg8[%c0_38, %c0_39, %c0_40], %88 {strides = array<i32>} : memref<4x8x32xf32, #tpu.memory_space<vmem>>, vector<4x8x32xf32>,
      %c0_41 = arith.constant 0 : index
      %c0_42 = arith.constant 0 : index
      %c0_43 = arith.constant 0 : index
      %90 = vector.load %arg9[%c0_41, %c0_42, %c0_43] : memref<4x8x32xf32, #tpu.memory_space<vmem>>, vector<4x8x32xf32>
      tpu.vector_store %arg9[%c0_41, %c0_42, %c0_43], %59 {strides = array<i32>} : memref<4x8x32xf32, #tpu.memory_space<vmem>>, vector<4x8x32xf32>,
    } else {
    }
    return
  }
  func.func @transform_0(%arg0: i32, %arg1: i32) -> (i32, i32, i32) {
    %c0_i32 = arith.constant 0 : i32
    %c0_i32_0 = arith.constant 0 : i32
    %c0_i32_1 = arith.constant 0 : i32
    return %arg0, %c0_i32, %c0_i32_0 : i32, i32, i32
  }
  func.func @transform_1(%arg0: i32, %arg1: i32) -> (i32, i32, i32, i32) {
    %c0_i32 = arith.constant 0 : i32
    %c0_i32_0 = arith.constant 0 : i32
    %c0_i32_1 = arith.constant 0 : i32
    return %arg0, %arg1, %c0_i32, %c0_i32_0 : i32, i32, i32, i32
  }
  func.func @transform_2(%arg0: i32, %arg1: i32) -> (i32, i32) {
    %c0_i32 = arith.constant 0 : i32
    %c0_i32_0 = arith.constant 0 : i32
    %c0_i32_1 = arith.constant 0 : i32
    return %c0_i32, %c0_i32_0 : i32, i32
  }
  func.func @transform_3(%arg0: i32, %arg1: i32) -> (i32, i32) {
    %c0_i32 = arith.constant 0 : i32
    %c0_i32_0 = arith.constant 0 : i32
    %c0_i32_1 = arith.constant 0 : i32
    return %c0_i32, %c0_i32_0 : i32, i32
  }
  func.func @transform_4(%arg0: i32, %arg1: i32) -> (i32, i32) {
    %c0_i32 = arith.constant 0 : i32
    %c0_i32_0 = arith.constant 0 : i32
    %c0_i32_1 = arith.constant 0 : i32
    return %c0_i32, %c0_i32_0 : i32, i32
  }
  func.func @transform_5(%arg0: i32, %arg1: i32) -> (i32, i32) {
    %c0_i32 = arith.constant 0 : i32
    %c0_i32_0 = arith.constant 0 : i32
    %c0_i32_1 = arith.constant 0 : i32
    return %c0_i32, %c0_i32_0 : i32, i32
  }
  func.func @transform_6(%arg0: i32, %arg1: i32) -> (i32, i32, i32) {
    %c0_i32 = arith.constant 0 : i32
    %c0_i32_0 = arith.constant 0 : i32
    %c0_i32_1 = arith.constant 0 : i32
    return %arg0, %c0_i32, %c0_i32_0 : i32, i32, i32
  }
  func.func @transform_7(%arg0: i32, %arg1: i32) -> (i32, i32, i32) {
    %c0_i32 = arith.constant 0 : i32
    %c0_i32_0 = arith.constant 0 : i32
    %c0_i32_1 = arith.constant 0 : i32
    return %arg0, %c0_i32, %c0_i32_0 : i32, i32, i32
  }
}

</mosaic_0001>

<llo_original>
// kernel: _embeddings_score_impl.1
$region0: #{_embeddings_score_impl.1}
  #allocation0 [shape = 'u32[]', space=smem, size = 0x4, offset = 0x4, fixed_abs, tag = 'smem constant byte address 0x4 - core index']
  #allocation1 [shape = 'u32[144,128]{1,0:T(1,128)}', space=vmem, size = 0x12000, scoped, tag = 'internal scratch']
  #allocation2 [shape = 'f32[4,8,128]{2,1,0:T(8,128)}', space=vmem, size = 0x4000, scoped, tag = 'scratch operand']
  %s0 = inlined_call_operand.hbm [shape: s32[1,4,8], index: 0, kind: input, shape index: {}]
  %s1 = inlined_call_operand.hbm [shape: s32[1,4,4,8], index: 1, kind: input, shape index: {}]
  %s2 = inlined_call_operand.hbm [shape: bf16[128,32], index: 2, kind: input, shape index: {}]
  %s3 = inlined_call_operand.hbm [shape: f32[8,32], index: 3, kind: input, shape index: {}]
  %s4 = inlined_call_operand.hbm [shape: f32[1,32], index: 4, kind: input, shape index: {}]
  %s5 = inlined_call_operand.hbm [shape: f32[1,32], index: 5, kind: input, shape index: {}]
  %s6 = inlined_call_operand.hbm [shape: f32[4,8,32], index: 6, kind: output, shape index: {0}]
  %s7 = inlined_call_operand.hbm [shape: f32[4,8,32], index: 7, kind: output, shape index: {1}]
  %8 = xla_tuple %s6, %s7
  %s9 = sld [smem:[#allocation0]]
  $region78: #{_embeddings_score_impl.1} parent=0
    _
  %s11 = ssub.s32 1, %s9
  %s12 = scalar_select 0, %s11, %s9
  $region1: #{_embeddings_score_impl.1} parent=0
    #allocation3 [shape = 'u8[2048]{0}', space=vmem, size = 0x800, scoped, tag = 'input window, operand 0, single buffered']
    #allocation4 [shape = 's32[1]{0}', space=sflag, size = 0x4, scoped, tag = 'scoped memory for _embeddings_score_impl.1']
    #allocation5 [shape = 's32[1]{0}', space=sflag, size = 0x4, scoped, tag = 'scoped memory for _embeddings_score_impl.1']
    #allocation6 [shape = 'u8[8192]{0}', space=vmem, size = 0x2000, scoped, tag = 'input window, operand 1, single buffered']
    #allocation7 [shape = 's32[1]{0}', space=sflag, size = 0x4, scoped, tag = 'scoped memory for _embeddings_score_impl.1']
    #allocation8 [shape = 'u8[32768]{0}', space=vmem, size = 0x8000, scoped, tag = 'input window, operand 2, single buffered']
    #allocation9 [shape = 'u8[4096]{0}', space=vmem, size = 0x1000, scoped, tag = 'input window, operand 3, single buffered']
    #allocation10 [shape = 's32[1]{0}', space=sflag, size = 0x4, scoped, tag = 'scoped memory for _embeddings_score_impl.1']
    #allocation11 [shape = 'u8[512]{0}', space=vmem, size = 0x400, scoped, tag = 'input window, operand 4, single buffered']
    #allocation12 [shape = 'u8[512]{0}', space=vmem, size = 0x400, scoped, tag = 'input window, operand 5, single buffered']
    #allocation13 [shape = 's32[1]{0}', space=sflag, size = 0x4, scoped, tag = 'scoped memory for _embeddings_score_impl.1']
    #allocation14 [shape = 'u8[16384]{0}', space=vmem, size = 0x4000, scoped, tag = 'output window, operand 0, single buffered']
    #allocation15 [shape = 'u8[16384]{0}', space=vmem, size = 0x4000, scoped, tag = 'output window, operand 1, single buffered']
    #allocation16 [shape = 's32[1]{0}', space=sflag, size = 0x4, scoped, tag = 'scoped memory for _embeddings_score_impl.1']
    %13 = vsyncpa [#allocation4], 0
    %14 = vsyncpa [#allocation7], 0
    %15 = vsyncpa [#allocation10], 0
    %16 = vsyncpa [#allocation13], 0
    %17 = vsyncpa [#allocation5], 0
    %18 = vsyncpa [#allocation16], 0
    // Predicated region
    $region2: #{_embeddings_score_impl.1} parent=1 // pred_check
      _
    $region3: #{_embeddings_score_impl.1} parent=1 // pred_check_branch
      %20 = sbr.rel (0) target = $region5
    $region4: #{_embeddings_score_impl.1} parent=1 // pred_region
      %s22 = ssub.s32 64, 64
      %23 = vsyncadd [#allocation4], %s22
      %s25 = sshll.u32 [#allocation3], 4
      %s26 = int_to_ptr.vmem [resolvable:$true] %s25
      %28 = dma.hbm_to_vmem [thread:$0]  %s0, 64, %s26, [#allocation4]
    $region5: #{_embeddings_score_impl.1} parent=1 // pred_fallthru
      _
    // Predicated region
    $region6: #{_embeddings_score_impl.1} parent=1 // pred_check
      _
    $region7: #{_embeddings_score_impl.1} parent=1 // pred_check_branch
      %30 = sbr.rel (0) target = $region9
    $region8: #{_embeddings_score_impl.1} parent=1 // pred_region
      %s32 = ssub.s32 256, 256
      %33 = vsyncadd [#allocation7], %s32
      %s34 = sshll.u32 [#allocation6], 4
      %s35 = int_to_ptr.vmem [resolvable:$true] %s34
      %40 = dma.hbm_to_vmem [thread:$0]  %s1, 256, %s35, [#allocation7], 64, 64, 4
    $region9: #{_embeddings_score_impl.1} parent=1 // pred_fallthru
      _
    // Predicated region
    $region10: #{_embeddings_score_impl.1} parent=1 // pred_check
      _
    $region11: #{_embeddings_score_impl.1} parent=1 // pred_check_branch
      %42 = sbr.rel (0) target = $region13
    $region12: #{_embeddings_score_impl.1} parent=1 // pred_region
      %s44 = ssub.s32 1024, 1024
      %45 = vsyncadd [#allocation7], %s44
      %s46 = sshll.u32 [#allocation8], 4
      %s47 = int_to_ptr.vmem [resolvable:$true] %s46
      %52 = dma.hbm_to_vmem [thread:$0]  %s2, 1024, %s47, [#allocation7], 64, 64, 4
    $region13: #{_embeddings_score_impl.1} parent=1 // pred_fallthru
      _
    // Predicated region
    $region14: #{_embeddings_score_impl.1} parent=1 // pred_check
      _
    $region15: #{_embeddings_score_impl.1} parent=1 // pred_check_branch
      %54 = sbr.rel (0) target = $region17
    $region16: #{_embeddings_score_impl.1} parent=1 // pred_region
      %s56 = ssub.s32 128, 128
      %57 = vsyncadd [#allocation10], %s56
      %s59 = sshll.u32 [#allocation9], 4
      %s60 = int_to_ptr.vmem [resolvable:$true] %s59
      %62 = dma.hbm_to_vmem [thread:$0]  %s3, 128, %s60, [#allocation10]
    $region17: #{_embeddings_score_impl.1} parent=1 // pred_fallthru
      _
    // Predicated region
    $region18: #{_embeddings_score_impl.1} parent=1 // pred_check
      _
    $region19: #{_embeddings_score_impl.1} parent=1 // pred_check_branch
      %64 = sbr.rel (0) target = $region21
    $region20: #{_embeddings_score_impl.1} parent=1 // pred_region
      %s66 = ssub.s32 16, 16
      %67 = vsyncadd [#allocation10], %s66
      %s69 = sshll.u32 [#allocation11], 4
      %s70 = int_to_ptr.vmem [resolvable:$true] %s69
      %72 = dma.hbm_to_vmem [thread:$0]  %s4, 16, %s70, [#allocation10]
    $region21: #{_embeddings_score_impl.1} parent=1 // pred_fallthru
      _
    // Predicated region
    $region22: #{_embeddings_score_impl.1} parent=1 // pred_check
      _
    $region23: #{_embeddings_score_impl.1} parent=1 // pred_check_branch
      %74 = sbr.rel (0) target = $region25
    $region24: #{_embeddings_score_impl.1} parent=1 // pred_region
      %s76 = ssub.s32 16, 16
      %77 = vsyncadd [#allocation13], %s76
      %s79 = sshll.u32 [#allocation12], 4
      %s80 = int_to_ptr.vmem [resolvable:$true] %s79
      %82 = dma.hbm_to_vmem [thread:$0]  %s5, 16, %s80, [#allocation13]
    $region25: #{_embeddings_score_impl.1} parent=1 // pred_fallthru
      _
    // Predicated region
    $region26: #{_embeddings_score_impl.1} parent=1 // pred_check
      _
    $region27: #{_embeddings_score_impl.1} parent=1 // pred_check_branch
      %84 = sbr.rel (0) target = $region29
    $region28: #{_embeddings_score_impl.1} parent=1 // pred_region
      %85 = dma.done [#allocation4], 64
    $region29: #{_embeddings_score_impl.1} parent=1 // pred_fallthru
      _
    // Predicated region
    $region30: #{_embeddings_score_impl.1} parent=1 // pred_check
      _
    $region31: #{_embeddings_score_impl.1} parent=1 // pred_check_branch
      %87 = sbr.rel (0) target = $region33
    $region32: #{_embeddings_score_impl.1} parent=1 // pred_region
      %88 = dma.done [#allocation7], 256
    $region33: #{_embeddings_score_impl.1} parent=1 // pred_fallthru
      _
    // Predicated region
    $region34: #{_embeddings_score_impl.1} parent=1 // pred_check
      _
    $region35: #{_embeddings_score_impl.1} parent=1 // pred_check_branch
      %90 = sbr.rel (0) target = $region37
    $region36: #{_embeddings_score_impl.1} parent=1 // pred_region
      %91 = dma.done [#allocation7], 1024
    $region37: #{_embeddings_score_impl.1} parent=1 // pred_fallthru
      _
    // Predicated region
    $region38: #{_embeddings_score_impl.1} parent=1 // pred_check
      _
    $region39: #{_embeddings_score_impl.1} parent=1 // pred_check_branch
      %93 = sbr.rel (0) target = $region41
    $region40: #{_embeddings_score_impl.1} parent=1 // pred_region
      %94 = dma.done [#allocation10], 128
    $region41: #{_embeddings_score_impl.1} parent=1 // pred_fallthru
      _
    // Predicated region
    $region42: #{_embeddings_score_impl.1} parent=1 // pred_check
      _
    $region43: #{_embeddings_score_impl.1} parent=1 // pred_check_branch
      %96 = sbr.rel (0) target = $region45
    $region44: #{_embeddings_score_impl.1} parent=1 // pred_region
      %97 = dma.done [#allocation10], 16
    $region45: #{_embeddings_score_impl.1} parent=1 // pred_fallthru
      _
    // Predicated region
    $region46: #{_embeddings_score_impl.1} parent=1 // pred_check
      _
    $region47: #{_embeddings_score_impl.1} parent=1 // pred_check_branch
      %99 = sbr.rel (0) target = $region49
    $region48: #{_embeddings_score_impl.1} parent=1 // pred_region
      %100 = dma.done [#allocation13], 16
    $region49: #{_embeddings_score_impl.1} parent=1 // pred_fallthru
      _
    %v102 = vlaneseq
    %v103 = vand.u32 %v102, 127
    %v104 = vld [vmem:[#allocation6] sm:$0xf]
    %v105 = vlaneseq
    %v106 = vshrl.u32 %v105, 7
    %v107 = vsub.s32 0, %v106
    %v108 = vrot.slane %v104, %v107
    %110 = vbcast.lane.b32.xlu0 %v108, 256
    %v111 = vpop.permute.xlu0 %110
    %v112 = vlaneseq
    %v113 = vshrl.u32 %v112, 7
    %v114 = vsub.s32 1, %v113
    %v115 = vrot.slane %v104, %v114
    %117 = vbcast.lane.b32.xlu0 %v115, 256
    %v118 = vpop.permute.xlu0 %117
    %v119 = vlaneseq
    %v120 = vshrl.u32 %v119, 7
    %v121 = vsub.s32 2, %v120
    %v122 = vrot.slane %v104, %v121
    %124 = vbcast.lane.b32.xlu0 %v122, 256
    %v125 = vpop.permute.xlu0 %124
    %v126 = vlaneseq
    %v127 = vshrl.u32 %v126, 7
    %v128 = vsub.s32 3, %v127
    %v129 = vrot.slane %v104, %v128
    %131 = vbcast.lane.b32.xlu0 %v129, 256
    %v132 = vpop.permute.xlu0 %131
    %vm133 = vcmp.eq.s32.totalorder %v111, %v103
    %vm134 = vcmp.eq.s32.totalorder %v118, %v103
    %vm135 = vcmp.eq.s32.totalorder %v125, %v103
    %vm136 = vcmp.eq.s32.totalorder %v132, %v103
    %v137 = vsel %vm133, 1, 0
    %v138 = vsel %vm134, 1, 0
    %v139 = vsel %vm135, 1, 0
    %v140 = vsel %vm136, 1, 0
    %v141 = vcvt.s32.f32 %v137
    %v142 = vcvt.s32.f32 %v138
    %v143 = vcvt.s32.f32 %v139
    %v144 = vcvt.s32.f32 %v140
    %s145 = scalar_lea.vmem [#allocation6], 4
    %v146 = vld [vmem:[%s145] sm:$0xf]
    %v147 = vlaneseq
    %v148 = vshrl.u32 %v147, 7
    %v149 = vsub.s32 0, %v148
    %v150 = vrot.slane %v146, %v149
    %152 = vbcast.lane.b32.xlu0 %v150, 256
    %v153 = vpop.permute.xlu0 %152
    %v154 = vlaneseq
    %v155 = vshrl.u32 %v154, 7
    %v156 = vsub.s32 1, %v155
    %v157 = vrot.slane %v146, %v156
    %159 = vbcast.lane.b32.xlu0 %v157, 256
    %v160 = vpop.permute.xlu0 %159
    %v161 = vlaneseq
    %v162 = vshrl.u32 %v161, 7
    %v163 = vsub.s32 2, %v162
    %v164 = vrot.slane %v146, %v163
    %166 = vbcast.lane.b32.xlu0 %v164, 256
    %v167 = vpop.permute.xlu0 %166
    %v168 = vlaneseq
    %v169 = vshrl.u32 %v168, 7
    %v170 = vsub.s32 3, %v169
    %v171 = vrot.slane %v146, %v170
    %173 = vbcast.lane.b32.xlu0 %v171, 256
    %v174 = vpop.permute.xlu0 %173
    %vm175 = vcmp.eq.s32.totalorder %v153, %v103
    %vm176 = vcmp.eq.s32.totalorder %v160, %v103
    %vm177 = vcmp.eq.s32.totalorder %v167, %v103
    %vm178 = vcmp.eq.s32.totalorder %v174, %v103
    %v179 = vsel %vm175, 1, 0
    %v180 = vsel %vm176, 1, 0
    %v181 = vsel %vm177, 1, 0
    %v182 = vsel %vm178, 1, 0
    %v183 = vcvt.s32.f32 %v179
    %v184 = vcvt.s32.f32 %v180
    %v185 = vcvt.s32.f32 %v181
    %v186 = vcvt.s32.f32 %v182
    %v187 = vadd.f32 %v141, %v183
    %v188 = vadd.f32 %v142, %v184
    %v189 = vadd.f32 %v143, %v185
    %v190 = vadd.f32 %v144, %v186
    %s191 = scalar_lea.vmem [#allocation6], 8
    %v192 = vld [vmem:[%s191] sm:$0xf]
    %v193 = vlaneseq
    %v194 = vshrl.u32 %v193, 7
    %v195 = vsub.s32 0, %v194
    %v196 = vrot.slane %v192, %v195
    %198 = vbcast.lane.b32.xlu0 %v196, 256
    %v199 = vpop.permute.xlu0 %198
    %v200 = vlaneseq
    %v201 = vshrl.u32 %v200, 7
    %v202 = vsub.s32 1, %v201
    %v203 = vrot.slane %v192, %v202
    %205 = vbcast.lane.b32.xlu0 %v203, 256
    %v206 = vpop.permute.xlu0 %205
    %v207 = vlaneseq
    %v208 = vshrl.u32 %v207, 7
    %v209 = vsub.s32 2, %v208
    %v210 = vrot.slane %v192, %v209
    %212 = vbcast.lane.b32.xlu0 %v210, 256
    %v213 = vpop.permute.xlu0 %212
    %v214 = vlaneseq
    %v215 = vshrl.u32 %v214, 7
    %v216 = vsub.s32 3, %v215
    %v217 = vrot.slane %v192, %v216
    %219 = vbcast.lane.b32.xlu0 %v217, 256
    %v220 = vpop.permute.xlu0 %219
    %vm221 = vcmp.eq.s32.totalorder %v199, %v103
    %vm222 = vcmp.eq.s32.totalorder %v206, %v103
    %vm223 = vcmp.eq.s32.totalorder %v213, %v103
    %vm224 = vcmp.eq.s32.totalorder %v220, %v103
    %v225 = vsel %vm221, 1, 0
    %v226 = vsel %vm222, 1, 0
    %v227 = vsel %vm223, 1, 0
    %v228 = vsel %vm224, 1, 0
    %v229 = vcvt.s32.f32 %v225
    %v230 = vcvt.s32.f32 %v226
    %v231 = vcvt.s32.f32 %v227
    %v232 = vcvt.s32.f32 %v228
    %v233 = vadd.f32 %v187, %v229
    %v234 = vadd.f32 %v188, %v230
    %v235 = vadd.f32 %v189, %v231
    %v236 = vadd.f32 %v190, %v232
    %s237 = scalar_lea.vmem [#allocation6], 12
    %v238 = vld [vmem:[%s237] sm:$0xf]
    %v239 = vlaneseq
    %v240 = vshrl.u32 %v239, 7
    %v241 = vsub.s32 0, %v240
    %v242 = vrot.slane %v238, %v241
    %244 = vbcast.lane.b32.xlu0 %v242, 256
    %v245 = vpop.permute.xlu0 %244
    %v246 = vlaneseq
    %v247 = vshrl.u32 %v246, 7
    %v248 = vsub.s32 1, %v247
    %v249 = vrot.slane %v238, %v248
    %251 = vbcast.lane.b32.xlu0 %v249, 256
    %v252 = vpop.permute.xlu0 %251
    %v253 = vlaneseq
    %v254 = vshrl.u32 %v253, 7
    %v255 = vsub.s32 2, %v254
    %v256 = vrot.slane %v238, %v255
    %258 = vbcast.lane.b32.xlu0 %v256, 256
    %v259 = vpop.permute.xlu0 %258
    %v260 = vlaneseq
    %v261 = vshrl.u32 %v260, 7
    %v262 = vsub.s32 3, %v261
    %v263 = vrot.slane %v238, %v262
    %265 = vbcast.lane.b32.xlu0 %v263, 256
    %v266 = vpop.permute.xlu0 %265
    %vm267 = vcmp.eq.s32.totalorder %v245, %v103
    %vm268 = vcmp.eq.s32.totalorder %v252, %v103
    %vm269 = vcmp.eq.s32.totalorder %v259, %v103
    %vm270 = vcmp.eq.s32.totalorder %v266, %v103
    %v271 = vsel %vm267, 1, 0
    %v272 = vsel %vm268, 1, 0
    %v273 = vsel %vm269, 1, 0
    %v274 = vsel %vm270, 1, 0
    %v275 = vcvt.s32.f32 %v271
    %v276 = vcvt.s32.f32 %v272
    %v277 = vcvt.s32.f32 %v273
    %v278 = vcvt.s32.f32 %v274
    %v279 = vadd.f32 %v233, %v275
    %v280 = vadd.f32 %v234, %v276
    %v281 = vadd.f32 %v235, %v277
    %v282 = vadd.f32 %v236, %v278
    %p283 = scmp.eq.s32.totalorder 0, 0
    // Predicated region
    $region50: #{_embeddings_score_impl.1} parent=1 // pred_check
      %p284 = pneg %p283
    $region51: #{_embeddings_score_impl.1} parent=1 // pred_check_branch
      %286 = sbr.rel (%p284) target = $region53
    $region52: #{_embeddings_score_impl.1} parent=1 // pred_region
      %287 = vst [vmem:[#allocation2] sm:$0xff] %v279
      %288 = vst [vmem:[#allocation2 + $0x8] sm:$0xff] %v280
      %289 = vst [vmem:[#allocation2 + $0x10] sm:$0xff] %v281
      %290 = vst [vmem:[#allocation2 + $0x18] sm:$0xff] %v282
    $region53: #{_embeddings_score_impl.1} parent=1 // pred_fallthru
      _
    %p291 = scmp.gt.s32.totalorder 0, 0
    // Predicated region
    $region54: #{_embeddings_score_impl.1} parent=1 // pred_check
      %p292 = pneg %p291
    $region55: #{_embeddings_score_impl.1} parent=1 // pred_check_branch
      %294 = sbr.rel (%p292) target = $region57
    $region56: #{_embeddings_score_impl.1} parent=1 // pred_region
      %v295 = vld [vmem:[#allocation2] sm:$0xff]
      %v296 = vld [vmem:[#allocation2 + $0x8] sm:$0xff]
      %v297 = vld [vmem:[#allocation2 + $0x10] sm:$0xff]
      %v298 = vld [vmem:[#allocation2 + $0x18] sm:$0xff]
      %v299 = vadd.f32 %v295, %v279
      %v300 = vadd.f32 %v296, %v280
      %v301 = vadd.f32 %v297, %v281
      %v302 = vadd.f32 %v298, %v282
      %303 = vst [vmem:[#allocation2] sm:$0xff] %v299
      %304 = vst [vmem:[#allocation2 + $0x8] sm:$0xff] %v300
      %305 = vst [vmem:[#allocation2 + $0x10] sm:$0xff] %v301
      %306 = vst [vmem:[#allocation2 + $0x18] sm:$0xff] %v302
    $region57: #{_embeddings_score_impl.1} parent=1 // pred_fallthru
      _
    // Predicated region
    $region58: #{_embeddings_score_impl.1} parent=1 // pred_check
      %p307 = pneg %p283
    $region59: #{_embeddings_score_impl.1} parent=1 // pred_check_branch
      %309 = sbr.rel (%p307) target = $region61
    $region60: #{_embeddings_score_impl.1} parent=1 // pred_region
      %v310 = vld [vmem:[#allocation8] sm:$0xf]
      %v311 = vld [vmem:[#allocation8 + $0x4] sm:$0xf]
      %v312 = vld [vmem:[#allocation8 + $0x8] sm:$0xf]
      %v313 = vld [vmem:[#allocation8 + $0xc] sm:$0xf]
      %v314 = vld [vmem:[#allocation8 + $0x10] sm:$0xf]
      %v315 = vld [vmem:[#allocation8 + $0x14] sm:$0xf]
      %v316 = vld [vmem:[#allocation8 + $0x18] sm:$0xf]
      %v317 = vld [vmem:[#allocation8 + $0x1c] sm:$0xf]
      %v318 = vld [vmem:[#allocation8 + $0x20] sm:$0xf]
      %v319 = vld [vmem:[#allocation8 + $0x24] sm:$0xf]
      %v320 = vld [vmem:[#allocation8 + $0x28] sm:$0xf]
      %v321 = vld [vmem:[#allocation8 + $0x2c] sm:$0xf]
      %v322 = vld [vmem:[#allocation8 + $0x30] sm:$0xf]
      %v323 = vld [vmem:[#allocation8 + $0x34] sm:$0xf]
      %v324 = vld [vmem:[#allocation8 + $0x38] sm:$0xf]
      %v325 = vld [vmem:[#allocation8 + $0x3c] sm:$0xf]
      %v326 = vld [vmem:[#allocation3] sm:$0xf]
      %v327 = vlaneseq
      %v328 = vshrl.u32 %v327, 7
      %v329 = vsub.s32 0, %v328
      %v330 = vrot.slane %v326, %v329
      %332 = vbcast.lane.b32.xlu0 %v330, 256
      %v333 = vpop.permute.xlu0 %332
      %v334 = vlaneseq
      %v335 = vshrl.u32 %v334, 7
      %v336 = vsub.s32 1, %v335
      %v337 = vrot.slane %v326, %v336
      %339 = vbcast.lane.b32.xlu0 %v337, 256
      %v340 = vpop.permute.xlu0 %339
      %v341 = vlaneseq
      %v342 = vshrl.u32 %v341, 7
      %v343 = vsub.s32 2, %v342
      %v344 = vrot.slane %v326, %v343
      %346 = vbcast.lane.b32.xlu0 %v344, 256
      %v347 = vpop.permute.xlu0 %346
      %v348 = vlaneseq
      %v349 = vshrl.u32 %v348, 7
      %v350 = vsub.s32 3, %v349
      %v351 = vrot.slane %v326, %v350
      %353 = vbcast.lane.b32.xlu0 %v351, 256
      %v354 = vpop.permute.xlu0 %353
      %vm355 = vcmp.eq.s32.totalorder %v333, %v103
      %vm356 = vcmp.eq.s32.totalorder %v340, %v103
      %vm357 = vcmp.eq.s32.totalorder %v347, %v103
      %vm358 = vcmp.eq.s32.totalorder %v354, %v103
      %v359 = vsel %vm355, 1, 0
      %v360 = vsel %vm356, 1, 0
      %v361 = vsel %vm357, 1, 0
      %v362 = vsel %vm358, 1, 0
      %v363 = vcvt.s32.f32 %v359
      %v364 = vcvt.s32.f32 %v360
      %v365 = vcvt.s32.f32 %v361
      %v366 = vcvt.s32.f32 %v362
      %v367 = vpack.c.bf16 %v363, %v363
      %v368 = vpack.c.bf16 %v364, %v364
      %v369 = vpack.c.bf16 %v365, %v365
      %v370 = vpack.c.bf16 %v366, %v366
      %v371 = vld [vmem:[#allocation2] sm:$0xff]
      %v372 = vld [vmem:[#allocation2 + $0x8] sm:$0xff]
      %v373 = vld [vmem:[#allocation2 + $0x10] sm:$0xff]
      %v374 = vld [vmem:[#allocation2 + $0x18] sm:$0xff]
      %v375 = vpack.c.bf16 %v371, %v371
      %v376 = vpack.c.bf16 %v372, %v372
      %v377 = vpack.c.bf16 %v373, %v373
      %v378 = vpack.c.bf16 %v374, %v374
      %v383 = vunpack.c.l.b16 %v367
      %v384 = vunpack.c.l.b16 %v368
      %v385 = vunpack.c.l.b16 %v369
      %v386 = vunpack.c.l.b16 %v370
      %v387 = vpack.c.b16 %v384, %v383
      %v388 = vpack.c.b16 %v386, %v385
      %v407 = vunpack.c.l.b16 %v310
      %v408 = vunpack.c.l.b16 %v311
      %v409 = vunpack.c.l.b16 %v312
      %v410 = vunpack.c.l.b16 %v313
      %v411 = vunpack.c.l.b16 %v314
      %v412 = vunpack.c.l.b16 %v315
      %v413 = vunpack.c.l.b16 %v316
      %v414 = vunpack.c.l.b16 %v317
      %v415 = vunpack.c.l.b16 %v318
      %v416 = vunpack.c.l.b16 %v319
      %v417 = vunpack.c.l.b16 %v320
      %v418 = vunpack.c.l.b16 %v321
      %v419 = vunpack.c.l.b16 %v322
      %v420 = vunpack.c.l.b16 %v323
      %v421 = vunpack.c.l.b16 %v324
      %v422 = vunpack.c.l.b16 %v325
      %v423 = vpack.c.b16 %v408, %v407
      %v424 = vpack.c.b16 %v410, %v409
      %v425 = vpack.c.b16 %v412, %v411
      %v426 = vpack.c.b16 %v414, %v413
      %v427 = vpack.c.b16 %v416, %v415
      %v428 = vpack.c.b16 %v418, %v417
      %v429 = vpack.c.b16 %v420, %v419
      %v430 = vpack.c.b16 %v422, %v421
      %439 = vmatprep.subr.bf16.mxu0 0
      %440 = vmatpush1.bf16.msra.mxu0 %v423
      %441 = vmatprep.subr.bf16.mxu0 0
      %442 = vmatpush1.bf16.msra.mxu0 %v424
      %443 = vmatprep.subr.bf16.mxu0 0
      %444 = vmatpush1.bf16.msra.mxu0 %v425
      %445 = vmatprep.subr.bf16.mxu0 0
      %446 = vmatpush1.bf16.msra.mxu0 %v426
      %447 = vmatprep.subr.bf16.mxu0 0
      %448 = vmatpush1.bf16.msra.mxu0 %v427
      %449 = vmatprep.subr.bf16.mxu0 0
      %450 = vmatpush1.bf16.msra.mxu0 %v428
      %451 = vmatprep.subr.bf16.mxu0 0
      %452 = vmatpush1.bf16.msra.mxu0 %v429
      %453 = vmatprep.subr.bf16.mxu0 0
      %454 = vmatpush1.bf16.msra.mxu0 %v430
      %455 = vmatprep.subr.bf16.mxu0 0
      %456 = vmatpush1.bf16.msra.mxu0 0
      %457 = vmatprep.subr.bf16.mxu0 0
      %458 = vmatpush1.bf16.msra.mxu0 0
      %459 = vmatprep.subr.bf16.mxu0 0
      %460 = vmatpush1.bf16.msra.mxu0 0
      %461 = vmatprep.subr.bf16.mxu0 0
      %462 = vmatpush1.bf16.msra.mxu0 0
      %463 = vmatprep.subr.bf16.mxu0 0
      %464 = vmatpush1.bf16.msra.mxu0 0
      %465 = vmatprep.subr.bf16.mxu0 0
      %466 = vmatpush1.bf16.msra.mxu0 0
      %467 = vmatprep.subr.bf16.mxu0 0
      %468 = vmatpush1.bf16.msra.mxu0 0
      %469 = vmatprep.subr.bf16.mxu0 0
      %470 = vmatpush1.bf16.msra.mxu0 0
      %471 = vmatprep.mubr.bf16.mxu0 0
      %472 = vmatmul.mubr.bf16.gmra.mrb[0].mxu0 %v387
      %v473 = vpop.f32.mrb[0].mxu0
      %v474 = vadd.f32 0.0, %v473
      %v475 = vpop.f32.mrb[0].mxu0
      %v476 = vpop.f32.mrb[0].mxu0
      %v477 = vadd.f32 0.0, %v476
      %v478 = vpop.f32.mrb[0].mxu0
      %479 = vmatprep.mubr.bf16.mxu0 0
      %480 = vmatmul.mubr.bf16.gmra.mrb[0].mxu0 %v388
      %v481 = vpop.f32.mrb[0].mxu0
      %v482 = vadd.f32 0.0, %v481
      %v483 = vpop.f32.mrb[0].mxu0
      %v484 = vpop.f32.mrb[0].mxu0
      %v485 = vadd.f32 0.0, %v484
      %v486 = vpop.f32.mrb[0].mxu0
      %487 = vdwg.mxu0
      %v492 = vunpack.c.l.b16 %v375
      %v493 = vunpack.c.l.b16 %v376
      %v494 = vunpack.c.l.b16 %v377
      %v495 = vunpack.c.l.b16 %v378
      %v496 = vpack.c.b16 %v493, %v492
      %v497 = vpack.c.b16 %v495, %v494
      %500 = vmatprep.subr.bf16.mxu0 0
      %501 = vmatpush1.bf16.msra.mxu0 %v423
      %502 = vmatprep.subr.bf16.mxu0 0
      %503 = vmatpush1.bf16.msra.mxu0 %v424
      %504 = vmatprep.subr.bf16.mxu0 0
      %505 = vmatpush1.bf16.msra.mxu0 %v425
      %506 = vmatprep.subr.bf16.mxu0 0
      %507 = vmatpush1.bf16.msra.mxu0 %v426
      %508 = vmatprep.subr.bf16.mxu0 0
      %509 = vmatpush1.bf16.msra.mxu0 %v427
      %510 = vmatprep.subr.bf16.mxu0 0
      %511 = vmatpush1.bf16.msra.mxu0 %v428
      %512 = vmatprep.subr.bf16.mxu0 0
      %513 = vmatpush1.bf16.msra.mxu0 %v429
      %514 = vmatprep.subr.bf16.mxu0 0
      %515 = vmatpush1.bf16.msra.mxu0 %v430
      %516 = vmatprep.subr.bf16.mxu0 0
      %517 = vmatpush1.bf16.msra.mxu0 0
      %518 = vmatprep.subr.bf16.mxu0 0
      %519 = vmatpush1.bf16.msra.mxu0 0
      %520 = vmatprep.subr.bf16.mxu0 0
      %521 = vmatpush1.bf16.msra.mxu0 0
      %522 = vmatprep.subr.bf16.mxu0 0
      %523 = vmatpush1.bf16.msra.mxu0 0
      %524 = vmatprep.subr.bf16.mxu0 0
      %525 = vmatpush1.bf16.msra.mxu0 0
      %526 = vmatprep.subr.bf16.mxu0 0
      %527 = vmatpush1.bf16.msra.mxu0 0
      %528 = vmatprep.subr.bf16.mxu0 0
      %529 = vmatpush1.bf16.msra.mxu0 0
      %530 = vmatprep.subr.bf16.mxu0 0
      %531 = vmatpush1.bf16.msra.mxu0 0
      %532 = vmatprep.mubr.bf16.mxu0 0
      %533 = vmatmul.mubr.bf16.gmra.mrb[0].mxu0 %v496
      %v534 = vpop.f32.mrb[0].mxu0
      %v535 = vadd.f32 0.0, %v534
      %v536 = vpop.f32.mrb[0].mxu0
      %v537 = vpop.f32.mrb[0].mxu0
      %v538 = vadd.f32 0.0, %v537
      %v539 = vpop.f32.mrb[0].mxu0
      %540 = vmatprep.mubr.bf16.mxu0 0
      %541 = vmatmul.mubr.bf16.gmra.mrb[0].mxu0 %v497
      %v542 = vpop.f32.mrb[0].mxu0
      %v543 = vadd.f32 0.0, %v542
      %v544 = vpop.f32.mrb[0].mxu0
      %v545 = vpop.f32.mrb[0].mxu0
      %v546 = vadd.f32 0.0, %v545
      %v547 = vpop.f32.mrb[0].mxu0
      %548 = vdwg.mxu0
      %v549 = vmul.f32 %v535, 0.25
      %v550 = vmul.f32 %v538, 0.25
      %v551 = vmul.f32 %v543, 0.25
      %v552 = vmul.f32 %v546, 0.25
      %v553 = vld [vmem:[#allocation9] sm:$0xff]
      %v554 = vadd.f32 %v474, %v553
      %v555 = vadd.f32 %v477, %v553
      %v556 = vadd.f32 %v482, %v553
      %v557 = vadd.f32 %v485, %v553
      %v558 = vadd.f32 %v554, %v549
      %v559 = vadd.f32 %v555, %v550
      %v560 = vadd.f32 %v556, %v551
      %v561 = vadd.f32 %v557, %v552
      %vm562 = vcmask 261120
      %v563 = vsel %vm562, %v558, 0.0
      %564 = vadd.xlane.f32.xlu0 %v563
      %v565 = vpop.xlane.xlu0 %564
      %v566 = vsel %vm562, %v559, 0.0
      %567 = vadd.xlane.f32.xlu0 %v566
      %v568 = vpop.xlane.xlu0 %567
      %v569 = vsel %vm562, %v560, 0.0
      %570 = vadd.xlane.f32.xlu0 %v569
      %v571 = vpop.xlane.xlu0 %570
      %v572 = vsel %vm562, %v561, 0.0
      %573 = vadd.xlane.f32.xlu0 %v572
      %v574 = vpop.xlane.xlu0 %573
      %v575 = vrcp.pop 32.0
      %v576 = vmul.f32 %v565, %v575
      %v577 = vmul.f32 %v568, %v575
      %v578 = vmul.f32 %v571, %v575
      %v579 = vmul.f32 %v574, %v575
      %v580 = vsub.f32 %v558, %v576
      %v581 = vsub.f32 %v559, %v577
      %v582 = vsub.f32 %v560, %v578
      %v583 = vsub.f32 %v561, %v579
      %v584 = vmul.f32 %v580, %v580
      %v585 = vmul.f32 %v581, %v581
      %v586 = vmul.f32 %v582, %v582
      %v587 = vmul.f32 %v583, %v583
      %v588 = vsel %vm562, %v584, 0.0
      %589 = vadd.xlane.f32.xlu0 %v588
      %v590 = vpop.xlane.xlu0 %589
      %v591 = vsel %vm562, %v585, 0.0
      %592 = vadd.xlane.f32.xlu0 %v591
      %v593 = vpop.xlane.xlu0 %592
      %v594 = vsel %vm562, %v586, 0.0
      %595 = vadd.xlane.f32.xlu0 %v594
      %v596 = vpop.xlane.xlu0 %595
      %v597 = vsel %vm562, %v587, 0.0
      %598 = vadd.xlane.f32.xlu0 %v597
      %v599 = vpop.xlane.xlu0 %598
      %v600 = vmul.f32 %v590, %v575
      %v601 = vmul.f32 %v593, %v575
      %v602 = vmul.f32 %v596, %v575
      %v603 = vmul.f32 %v599, %v575
      %v604 = vadd.f32 %v600, 1e-12
      %v605 = vadd.f32 %v601, 1e-12
      %v606 = vadd.f32 %v602, 1e-12
      %v607 = vadd.f32 %v603, 1e-12
      %v608 = vrsqrt.pop %v604
      %v609 = vrsqrt.pop %v605
      %v610 = vrsqrt.pop %v606
      %v611 = vrsqrt.pop %v607
      %v612 = vmul.f32 %v580, %v608
      %v613 = vmul.f32 %v581, %v609
      %v614 = vmul.f32 %v582, %v610
      %v615 = vmul.f32 %v583, %v611
      %v616 = vld [vmem:[#allocation11] sm:$0x1]
      %v618 = vlaneseq
      %v619 = vshrl.u32 %v618, 7
      %v620 = vsub.s32 0, %v619
      %v621 = vrot.slane %v616, %v620
      %v623 = vmul.f32 %v612, %v621
      %v624 = vmul.f32 %v613, %v621
      %v625 = vmul.f32 %v614, %v621
      %v626 = vmul.f32 %v615, %v621
      %v627 = vld [vmem:[#allocation12] sm:$0x1]
      %v629 = vlaneseq
      %v630 = vshrl.u32 %v629, 7
      %v631 = vsub.s32 0, %v630
      %v632 = vrot.slane %v627, %v631
      %v634 = vadd.f32 %v623, %v632
      %v635 = vadd.f32 %v624, %v632
      %v636 = vadd.f32 %v625, %v632
      %v637 = vadd.f32 %v626, %v632
      %638 = vst.msk [vmem:[#allocation14] sm:$0xff] %vm562, %v634
      %639 = vst.msk [vmem:[#allocation14 + $0x8] sm:$0xff] %vm562, %v635
      %640 = vst.msk [vmem:[#allocation14 + $0x10] sm:$0xff] %vm562, %v636
      %641 = vst.msk [vmem:[#allocation14 + $0x18] sm:$0xff] %vm562, %v637
      %642 = vst.msk [vmem:[#allocation15] sm:$0xff] %vm562, %v549
      %643 = vst.msk [vmem:[#allocation15 + $0x8] sm:$0xff] %vm562, %v550
      %644 = vst.msk [vmem:[#allocation15 + $0x10] sm:$0xff] %vm562, %v551
      %645 = vst.msk [vmem:[#allocation15 + $0x18] sm:$0xff] %vm562, %v552
    $region61: #{_embeddings_score_impl.1} parent=1 // pred_fallthru
      _
    // Predicated region
    $region62: #{_embeddings_score_impl.1} parent=1 // pred_check
      _
    $region63: #{_embeddings_score_impl.1} parent=1 // pred_check_branch
      %647 = sbr.rel (0) target = $region65
    $region64: #{_embeddings_score_impl.1} parent=1 // pred_region
      %s649 = ssub.s32 512, 512
      %650 = vsyncadd [#allocation5], %s649
      %s651 = sshll.u32 [#allocation14], 4
      %s652 = int_to_ptr.vmem [resolvable:$true] %s651
      %657 = dma.vmem_to_hbm [thread:$0]  %s652, 512, %s6, [#allocation5], 128, 128, 8
    $region65: #{_embeddings_score_impl.1} parent=1 // pred_fallthru
      _
    // Predicated region
    $region66: #{_embeddings_score_impl.1} parent=1 // pred_check
      _
    $region67: #{_embeddings_score_impl.1} parent=1 // pred_check_branch
      %659 = sbr.rel (0) target = $region69
    $region68: #{_embeddings_score_impl.1} parent=1 // pred_region
      %s661 = ssub.s32 512, 512
      %662 = vsyncadd [#allocation16], %s661
      %s663 = sshll.u32 [#allocation15], 4
      %s664 = int_to_ptr.vmem [resolvable:$true] %s663
      %669 = dma.vmem_to_hbm [thread:$0]  %s664, 512, %s7, [#allocation16], 128, 128, 8
    $region69: #{_embeddings_score_impl.1} parent=1 // pred_fallthru
      _
    // Predicated region
    $region70: #{_embeddings_score_impl.1} parent=1 // pred_check
      _
    $region71: #{_embeddings_score_impl.1} parent=1 // pred_check_branch
      %671 = sbr.rel (0) target = $region73
    $region72: #{_embeddings_score_impl.1} parent=1 // pred_region
      %672 = dma.done [#allocation5], 512
    $region73: #{_embeddings_score_impl.1} parent=1 // pred_fallthru
      _
    // Predicated region
    $region74: #{_embeddings_score_impl.1} parent=1 // pred_check
      _
    $region75: #{_embeddings_score_impl.1} parent=1 // pred_check_branch
      %674 = sbr.rel (0) target = $region77
    $region76: #{_embeddings_score_impl.1} parent=1 // pred_region
      %675 = dma.done [#allocation16], 512
    $region77: #{_embeddings_score_impl.1} parent=1 // pred_fallthru
      _
    %676 = vsyncpa [#allocation4], 1
    %677 = vsyncpa [#allocation7], 1
    %678 = vsyncpa [#allocation10], 1
    %679 = vsyncpa [#allocation13], 1
    %680 = vsyncpa [#allocation5], 1
    %681 = vsyncpa [#allocation16], 1

</llo_original>
